<compile_context>
chip_gen: v5e
topology: v5e:2x2
jax: 0.10.0
libtpu: 0.0.40
codegen_flags: <defaults>
</compile_context>

<pallas_src>
import functools

import jax
import jax.numpy as jnp
from jax.experimental import pallas as pl
from jax.experimental.pallas import tpu as pltpu

LN_EPS = 1e-5


def _transition_kernel(x_ref, w1_ref, b1_ref, w2_ref, b2_ref, o_ref, *, act_dtype):
    # x_ref: (TILE, d_in) tile of rows; weights are full arrays resident in VMEM.
    xf = x_ref[...].astype(jnp.float32)

    # --- LayerNorm over last dim (stats in f32, one-pass variance) ---
    mean = jnp.mean(xf, axis=-1, keepdims=True)
    msq = jnp.mean(xf * xf, axis=-1, keepdims=True)
    var = msq - mean * mean
    xn = (xf - mean) * jax.lax.rsqrt(var + LN_EPS)
    # gamma/beta are folded into w1/b1 at parameter-prep time (see
    # fold_ln_affine_into_linear1), so no affine here.

    # --- Linear1 + GELU ---
    # Matmul operands in the weight dtype (bf16 -> full-rate MXU); f32 accumulation.
    h = jnp.dot(xn.astype(w1_ref.dtype), w1_ref[...],
                preferred_element_type=jnp.float32)
    # Bias add + GELU in act_dtype (bf16 on v6e/v7x, f32 on v5e).
    h = h.astype(act_dtype) + b1_ref[...].astype(act_dtype)
    # tanh-form GELU runs on the EUP (separate bundle slot from the VALU).
    h = jax.nn.gelu(h, approximate=True)

    # --- Linear2 ---
    y = jnp.dot(h.astype(w2_ref.dtype), w2_ref[...],
                preferred_element_type=jnp.float32) + b2_ref[...].astype(jnp.float32)

    o_ref[...] = y.astype(o_ref.dtype)


def _round_up(a, b):
    return (a + b - 1) // b * b


def _default_act_dtype(weight_dtype):
    """bf16 GELU on chips with bf16 VALU/EUP (v6e/v7x), f32 on v5e."""
    try:
        kind = jax.devices()[0].device_kind.lower()
    except Exception:
        kind = ""
    if "v5e" in kind or "v5 lite" in kind or "v5lite" in kind:
        return jnp.float32
    if jnp.dtype(weight_dtype).itemsize == 2:
        return jnp.dtype(weight_dtype)
    return jnp.float32


def fold_ln_affine_into_linear1(gamma, beta, w1, b1):
    """One-time fold of the LayerNorm affine into Linear1: do at init, not per call.

    (xn * gamma + beta) @ w1 + b1 == xn @ (gamma[:, None] * w1) + (beta @ w1 + b1)
    """
    w1f = w1.astype(jnp.float32)
    w1_folded = (gamma.astype(jnp.float32)[:, None] * w1f).astype(w1.dtype)
    b1_folded = beta.astype(jnp.float32) @ w1f + b1.astype(jnp.float32)
    return w1_folded, b1_folded


def transition_pallas(x, w1, b1, w2, b2, *, row_tile=1024,
                      single_buffer_weights=False, act_dtype=None):
    """x: [..., seq, d_in]; w1/b1 are the LN-affine-folded Linear1 params.

    Returns same shape/dtype as x.
    """
    d_in = x.shape[-1]
    hidden = w1.shape[1]
    orig_shape = x.shape
    x2d = x.reshape(-1, d_in)
    rows = x2d.shape[0]

    if act_dtype is None:
        act_dtype = _default_act_dtype(w1.dtype)

    # Sublane alignment: 8 rows for 4-byte dtypes, 16 for 2-byte (bf16) dtypes.
    sub = 16 if jnp.dtype(x.dtype).itemsize == 2 else 8
    tile = min(_round_up(row_tile, sub), _round_up(rows, sub))
    # Keep the grid >= 2 steps so both v7x TensorCores get work (rows is the
    # only "parallel" axis).  No effect on tiny inputs beyond shrinking the tile.
    tile = max(sub, min(tile, _round_up(pl.cdiv(rows, 2), sub)))

    # No host-side padding copy: over-cover the rows axis with pl.cdiv and let
    # Pallas pad the boundary block (rows are independent; out-of-range rows of
    # the boundary output block are discarded at writeback).
    grid = (pl.cdiv(rows, tile),)

    # Biases as (1, C) so they are well-formed 2-D VMEM tiles.
    b1_2 = b1.reshape(1, hidden)
    b2_2 = b2.reshape(1, d_in)

    # Grid-invariant blocks (constant index_map).  Optionally single-buffer them
    # (halves weight VMEM; mainly matters on v7x with large d_in*hidden).
    const_kw = dict(pipeline_mode=pl.Buffered(1)) if single_buffer_weights else {}

    kernel = functools.partial(_transition_kernel, act_dtype=act_dtype)

    out = pl.pallas_call(
        kernel,
        out_shape=jax.ShapeDtypeStruct((rows, d_in), x.dtype),
        grid=grid,
        in_specs=[
            pl.BlockSpec((tile, d_in), lambda i: (i, 0)),               # x rows tile
            pl.BlockSpec((d_in, hidden), lambda i: (0, 0), **const_kw), # w1 (full, LN-folded)
            pl.BlockSpec((1, hidden), lambda i: (0, 0), **const_kw),    # b1 (LN-folded)
            pl.BlockSpec((hidden, d_in), lambda i: (0, 0), **const_kw), # w2 (full)
            pl.BlockSpec((1, d_in), lambda i: (0, 0), **const_kw),      # b2
        ],
        out_specs=pl.BlockSpec((tile, d_in), lambda i: (i, 0)),
        compiler_params=pltpu.CompilerParams(
            dimension_semantics=("parallel",),
            # Actual demand is a few MiB (x/out tiles double-buffered + weights
            # + f32 intermediates); 48 MiB leaves headroom on every generation
            # including v7x's 64 MiB physical VMEM.
            vmem_limit_bytes=48 * 1024 * 1024),
    )(x2d, w1, b1_2, w2, b2_2)

    return out.reshape(orig_shape)


def transition_reference(x, gamma, beta, w1, b1, w2, b2):
    """Pure-JAX reference of the module forward (exact-erf GELU, unfolded LN affine)."""
    xf = x.astype(jnp.float32)
    mean = jnp.mean(xf, axis=-1, keepdims=True)
    var = jnp.mean((xf - mean) ** 2, axis=-1, keepdims=True)
    xn = (xf - mean) * jax.lax.rsqrt(var + LN_EPS)
    xn = xn * gamma.astype(jnp.float32) + beta.astype(jnp.float32)
    h = jnp.dot(xn.astype(w1.dtype), w1,
                preferred_element_type=jnp.float32) + b1.astype(jnp.float32)
    h = jax.nn.gelu(h, approximate=False)   # torch.nn.GELU() default (exact erf)
    y = jnp.dot(h.astype(w2.dtype), w2,
                preferred_element_type=jnp.float32) + b2.astype(jnp.float32)
    return y.astype(x.dtype)


def init_transition_params(key, d_in, n, dtype=jnp.bfloat16):
    """Deterministic params matching the shapes in Transition.__init__.

    - layer_norm: weight=1, bias=0
    - linear_1 (init='relu'): trunc-normal weight, std=sqrt(2/d_in)/0.8796..., bias=0
    - linear_2 (init='final'): reference zero-inits the weight; we use small
      deterministic nonzero values so the kernel output is nontrivial.
    """
    hidden = n * d_in
    k1, k2 = jax.random.split(key)
    gamma = jnp.ones((d_in,), jnp.float32)
    beta = jnp.zeros((d_in,), jnp.float32)

    std1 = (2.0 / d_in) ** 0.5 / 0.8796256610342398
    # trunc_normal_ truncates at +/- 2 std by default
    w1 = (jax.random.truncated_normal(k1, -2.0, 2.0, (d_in, hidden), jnp.float32)
          * std1).astype(dtype)
    b1 = jnp.zeros((hidden,), jnp.float32)

    # TODO(synk): reference init='final' is all-zero weights; using small values instead.
    w2 = (jax.random.normal(k2, (hidden, d_in), jnp.float32) * (1.0 / hidden)).astype(dtype)
    b2 = jnp.zeros((d_in,), jnp.float32)
    return gamma, beta, w1, b1, w2, b2


if __name__ == "__main__":
    # Small, lane-dense shapes consistent with the module: x is [..., seq, d_in].
    d_in, n = 128, 4
    key = jax.random.PRNGKey(0)
    kx1, kx2, kp = jax.random.split(key, 3)

    gamma, beta, w1, b1, w2, b2 = init_transition_params(kp, d_in, n, dtype=jnp.bfloat16)
    # One-time fold of the LN affine into Linear1 (done at init, not per call).
    w1_f, b1_f = fold_ln_affine_into_linear1(gamma, beta, w1, b1)

    fwd = jax.jit(functools.partial(transition_pallas, row_tile=1024))

    # TODO(synk): the module's optional chunk_size path (chunk_layer) is just a
    # memory-saving loop over the same math; the flattened-rows grid already
    # covers it, so it is not reproduced separately.

    # Test 1: aligned row count (2*8 = 16 rows).
    x1 = jax.random.normal(kx1, (2, 8, d_in), jnp.float32).astype(jnp.bfloat16)
    # Test 2: ragged row count (3*7 = 21 rows) to exercise the boundary tile.
    x2 = jax.random.normal(kx2, (3, 7, d_in), jnp.float32).astype(jnp.bfloat16)

    for x in (x1, x2):
        y = fwd(x, w1_f, b1_f, w2, b2)
        jax.block_until_ready(y)
        y_ref = transition_reference(x, gamma, beta, w1, b1, w2, b2)
        assert y.shape == x.shape and y.dtype == x.dtype
        err = float(jnp.max(jnp.abs(y.astype(jnp.float32) - y_ref.astype(jnp.float32))))
        # tanh-GELU (+ bf16 activation on v6e/v7x) vs exact-erf f32 reference.
        assert err < 2e-2, f"mismatch vs reference: max abs err {err}"

    print("KERNEL_OK")
</pallas_src>

<mosaic_0001>
module attributes {stable_mosaic.version = 11 : i64} {
  func.func @_transition_kernel(%arg0: i32, %arg1: memref<16x128xbf16, #tpu.memory_space<vmem>>, %arg2: memref<128x512xbf16, #tpu.memory_space<vmem>>, %arg3: memref<1x512xf32, #tpu.memory_space<vmem>>, %arg4: memref<512x128xbf16, #tpu.memory_space<vmem>>, %arg5: memref<1x128xf32, #tpu.memory_space<vmem>>, %arg6: memref<16x128xbf16, #tpu.memory_space<vmem>>) attributes {dimension_semantics = [#tpu.dimension_semantics<parallel>], iteration_bounds = array<i64: 1>, scalar_prefetch = 0 : i64, scratch_operands = 0 : i64, tpu.core_type = #tpu.core_type<tc>, window_params = [{transform_indices = @transform_0, window_bounds = array<i64: 16, 128>}, {pipeline_mode = #tpu.pipeline_mode<synchronous>, transform_indices = @transform_1, window_bounds = array<i64: 128, 512>}, {pipeline_mode = #tpu.pipeline_mode<synchronous>, transform_indices = @transform_2, window_bounds = array<i64: 1, 512>}, {pipeline_mode = #tpu.pipeline_mode<synchronous>, transform_indices = @transform_3, window_bounds = array<i64: 512, 128>}, {pipeline_mode = #tpu.pipeline_mode<synchronous>, transform_indices = @transform_4, window_bounds = array<i64: 1, 128>}, {transform_indices = @transform_5, window_bounds = array<i64: 16, 128>}]} {
    %c0 = arith.constant 0 : index
    %c0_0 = arith.constant 0 : index
    %0 = vector.load %arg1[%c0, %c0_0] : memref<16x128xbf16, #tpu.memory_space<vmem>>, vector<16x128xbf16>
    %1 = arith.extf %0 : vector<16x128xbf16> to vector<16x128xf32>
    %cst = arith.constant dense<0.000000e+00> : vector<16xf32>
    %2 = vector.multi_reduction <add>, %1, %cst [1] : vector<16x128xf32> to vector<16xf32>
    %3 = vector.shape_cast %2 : vector<16xf32> to vector<16x1xf32>
    %cst_1 = arith.constant 1.280000e+02 : f32
    %4 = vector.broadcast %cst_1 : f32 to vector<16x1xf32>
    %5 = arith.divf %3, %4 : vector<16x1xf32>
    %6 = arith.mulf %1, %1 : vector<16x128xf32>
    %cst_2 = arith.constant dense<0.000000e+00> : vector<16xf32>
    %7 = vector.multi_reduction <add>, %6, %cst_2 [1] : vector<16x128xf32> to vector<16xf32>
    %8 = vector.shape_cast %7 : vector<16xf32> to vector<16x1xf32>
    %cst_3 = arith.constant 1.280000e+02 : f32
    %9 = vector.broadcast %cst_3 : f32 to vector<16x1xf32>
    %10 = arith.divf %8, %9 : vector<16x1xf32>
    %11 = arith.mulf %5, %5 : vector<16x1xf32>
    %12 = arith.subf %10, %11 : vector<16x1xf32>
    %13 = vector.broadcast %5 : vector<16x1xf32> to vector<16x128xf32>
    %14 = arith.subf %1, %13 : vector<16x128xf32>
    %cst_4 = arith.constant 9.99999974E-6 : f32
    %15 = vector.broadcast %cst_4 : f32 to vector<16x1xf32>
    %16 = arith.addf %12, %15 : vector<16x1xf32>
    %17 = math.rsqrt %16 : vector<16x1xf32>
    %18 = vector.broadcast %17 : vector<16x1xf32> to vector<16x128xf32>
    %19 = arith.mulf %14, %18 : vector<16x128xf32>
    %20 = arith.truncf %19 : vector<16x128xf32> to vector<16x128xbf16>
    %c0_5 = arith.constant 0 : index
    %c0_6 = arith.constant 0 : index
    %21 = vector.load %arg2[%c0_5, %c0_6] : memref<128x512xbf16, #tpu.memory_space<vmem>>, vector<128x512xbf16>
    %cst_7 = arith.constant dense<0.000000e+00> : vector<16x512xf32>
    %22 = tpu.matmul %20, %21, %cst_7 {dimension_numbers = #tpu.dot_dimension_numbers<[1], [0], [0], [1], [0, 0, 1, 1], [], []>} : vector<16x128xbf16>, vector<128x512xbf16>, vector<16x512xf32> -> vector<16x512xf32>
    %23 = arith.truncf %22 : vector<16x512xf32> to vector<16x512xbf16>
    %c0_8 = arith.constant 0 : index
    %c0_9 = arith.constant 0 : index
    %24 = vector.load %arg3[%c0_8, %c0_9] : memref<1x512xf32, #tpu.memory_space<vmem>>, vector<1x512xf32>
    %25 = arith.truncf %24 : vector<1x512xf32> to vector<1x512xbf16>
    %26 = vector.broadcast %25 : vector<1x512xbf16> to vector<16x512xbf16>
    %27 = arith.addf %23, %26 : vector<16x512xbf16>
    %28 = arith.mulf %27, %27 : vector<16x512xbf16>
    %29 = arith.mulf %27, %28 : vector<16x512xbf16>
    %cst_10 = arith.constant 4.467770e-02 : bf16
    %30 = vector.broadcast %cst_10 : bf16 to vector<16x512xbf16>
    %31 = arith.mulf %30, %29 : vector<16x512xbf16>
    %32 = arith.addf %27, %31 : vector<16x512xbf16>
    %cst_11 = arith.constant 7.968750e-01 : bf16
    %33 = vector.broadcast %cst_11 : bf16 to vector<16x512xbf16>
    %34 = arith.mulf %33, %32 : vector<16x512xbf16>
    %35 = math.tanh %34 : vector<16x512xbf16>
    %cst_12 = arith.constant 1.000000e+00 : bf16
    %36 = vector.broadcast %cst_12 : bf16 to vector<16x512xbf16>
    %37 = arith.addf %36, %35 : vector<16x512xbf16>
    %cst_13 = arith.constant 5.000000e-01 : bf16
    %38 = vector.broadcast %cst_13 : bf16 to vector<16x512xbf16>
    %39 = arith.mulf %38, %37 : vector<16x512xbf16>
    %40 = arith.mulf %27, %39 : vector<16x512xbf16>
    %c0_14 = arith.constant 0 : index
    %c0_15 = arith.constant 0 : index
    %41 = vector.load %arg4[%c0_14, %c0_15] : memref<512x128xbf16, #tpu.memory_space<vmem>>, vector<512x128xbf16>
    %cst_16 = arith.constant dense<0.000000e+00> : vector<16x128xf32>
    %42 = tpu.matmul %40, %41, %cst_16 {dimension_numbers = #tpu.dot_dimension_numbers<[1], [0], [0], [1], [0, 0, 1, 1], [], []>} : vector<16x512xbf16>, vector<512x128xbf16>, vector<16x128xf32> -> vector<16x128xf32>
    %c0_17 = arith.constant 0 : index
    %c0_18 = arith.constant 0 : index
    %43 = vector.load %arg5[%c0_17, %c0_18] : memref<1x128xf32, #tpu.memory_space<vmem>>, vector<1x128xf32>
    %44 = vector.broadcast %43 : vector<1x128xf32> to vector<16x128xf32>
    %45 = arith.addf %42, %44 : vector<16x128xf32>
    %46 = arith.truncf %45 : vector<16x128xf32> to vector<16x128xbf16>
    %c0_19 = arith.constant 0 : index
    %c0_20 = arith.constant 0 : index
    %47 = vector.load %arg6[%c0_19, %c0_20] : memref<16x128xbf16, #tpu.memory_space<vmem>>, vector<16x128xbf16>
    tpu.vector_store %arg6[%c0_19, %c0_20], %46 {strides = array<i32>} : memref<16x128xbf16, #tpu.memory_space<vmem>>, vector<16x128xbf16>,
    return
  }
  func.func @transform_0(%arg0: i32) -> (i32, i32) {
    %c0_i32 = arith.constant 0 : i32
    %c0_i32_0 = arith.constant 0 : i32
    return %arg0, %c0_i32 : i32, i32
  }
  func.func @transform_1(%arg0: i32) -> (i32, i32) {
    %c0_i32 = arith.constant 0 : i32
    %c0_i32_0 = arith.constant 0 : i32
    %c0_i32_1 = arith.constant 0 : i32
    return %c0_i32, %c0_i32_0 : i32, i32
  }
  func.func @transform_2(%arg0: i32) -> (i32, i32) {
    %c0_i32 = arith.constant 0 : i32
    %c0_i32_0 = arith.constant 0 : i32
    %c0_i32_1 = arith.constant 0 : i32
    return %c0_i32, %c0_i32_0 : i32, i32
  }
  func.func @transform_3(%arg0: i32) -> (i32, i32) {
    %c0_i32 = arith.constant 0 : i32
    %c0_i32_0 = arith.constant 0 : i32
    %c0_i32_1 = arith.constant 0 : i32
    return %c0_i32, %c0_i32_0 : i32, i32
  }
  func.func @transform_4(%arg0: i32) -> (i32, i32) {
    %c0_i32 = arith.constant 0 : i32
    %c0_i32_0 = arith.constant 0 : i32
    %c0_i32_1 = arith.constant 0 : i32
    return %c0_i32, %c0_i32_0 : i32, i32
  }
  func.func @transform_5(%arg0: i32) -> (i32, i32) {
    %c0_i32 = arith.constant 0 : i32
    %c0_i32_0 = arith.constant 0 : i32
    return %arg0, %c0_i32 : i32, i32
  }
}

</mosaic_0001>

<llo_original>
// kernel: transition_pallas.1
$region0: #{transition_pallas.1}
  #allocation0 [shape = 'u32[]', space=smem, size = 0x4, offset = 0x4, fixed_abs, tag = 'smem constant byte address 0x4 - core index']
  #allocation1 [shape = 'u32[72,128]{1,0:T(1,128)}', space=vmem, size = 0x9000, scoped, tag = 'internal scratch']
  %s0 = inlined_call_operand.hbm [shape: bf16[16,128], index: 0, kind: input, shape index: {}]
  %s1 = inlined_call_operand.hbm [shape: bf16[128,512], index: 1, kind: input, shape index: {}]
  %s2 = inlined_call_operand.vmem [shape: f32[1,512], index: 2, kind: input, shape index: {}]
  %s3 = inlined_call_operand.hbm [shape: bf16[512,128], index: 3, kind: input, shape index: {}]
  %s4 = inlined_call_operand.vmem [shape: f32[1,128], index: 4, kind: input, shape index: {}]
  %s5 = inlined_call_operand.hbm [shape: bf16[16,128], index: 5, kind: output, shape index: {}]
  %s6 = sld [smem:[#allocation0]]
  $region42: #{transition_pallas.1} parent=0
    _
  %s8 = ssub.s32 1, %s6
  %s9 = scalar_select 0, %s8, %s6
  $region1: #{transition_pallas.1} parent=0
    #allocation2 [shape = 'u8[4096]{0}', space=vmem, size = 0x1000, scoped, tag = 'input window, operand 0, single buffered']
    #allocation3 [shape = 's32[1]{0}', space=sflag, size = 0x4, scoped, tag = 'scoped memory for transition_pallas.1']
    #allocation4 [shape = 's32[1]{0}', space=sflag, size = 0x4, scoped, tag = 'scoped memory for transition_pallas.1']
    #allocation5 [shape = 'u8[131072]{0}', space=vmem, size = 0x20000, scoped, tag = 'input window, operand 1, single buffered']
    #allocation6 [shape = 's32[1]{0}', space=sflag, size = 0x4, scoped, tag = 'scoped memory for transition_pallas.1']
    #allocation7 [shape = 'u8[131072]{0}', space=vmem, size = 0x20000, scoped, tag = 'input window, operand 3, single buffered']
    #allocation8 [shape = 'u8[4096]{0}', space=vmem, size = 0x1000, scoped, tag = 'output window, operand 0, single buffered']
    %10 = vsyncpa [#allocation3], 0
    %11 = vsyncpa [#allocation6], 0
    %12 = vsyncpa [#allocation4], 0
    // Predicated region
    $region2: #{transition_pallas.1} parent=1 // pred_check
      _
    $region3: #{transition_pallas.1} parent=1 // pred_check_branch
      %14 = sbr.rel (0) target = $region5
    $region4: #{transition_pallas.1} parent=1 // pred_region
      %16 = vsyncadd [#allocation3], 0
      %s17 = sshll.u32 %s0, 4
      %s18 = int_to_ptr.hbm [resolvable:$true] %s17
      %s19 = sshll.u32 [#allocation2], 4
      %s20 = int_to_ptr.vmem [resolvable:$true] %s19
      %25 = dma.hbm_to_vmem [thread:$0]  %s18, 128, %s20, [#allocation3], 64, 64, 4
    $region5: #{transition_pallas.1} parent=1 // pred_fallthru
      _
    // Predicated region
    $region6: #{transition_pallas.1} parent=1 // pred_check
      _
    $region7: #{transition_pallas.1} parent=1 // pred_check_branch
      %27 = sbr.rel (0) target = $region9
    $region8: #{transition_pallas.1} parent=1 // pred_region
      %29 = vsyncadd [#allocation6], 0
      %s30 = sshll.u32 %s1, 4
      %s31 = int_to_ptr.hbm [resolvable:$true] %s30
      %s32 = sshll.u32 [#allocation5], 4
      %s33 = int_to_ptr.vmem [resolvable:$true] %s32
      %38 = dma.hbm_to_vmem [thread:$0]  %s31, 4096, %s33, [#allocation6], 256, 256, 16
    $region9: #{transition_pallas.1} parent=1 // pred_fallthru
      _
    // Predicated region
    $region10: #{transition_pallas.1} parent=1 // pred_check
      _
    $region11: #{transition_pallas.1} parent=1 // pred_check_branch
      %40 = sbr.rel (0) target = $region13
    $region12: #{transition_pallas.1} parent=1 // pred_region
      _
    $region13: #{transition_pallas.1} parent=1 // pred_fallthru
      _
    // Predicated region
    $region14: #{transition_pallas.1} parent=1 // pred_check
      _
    $region15: #{transition_pallas.1} parent=1 // pred_check_branch
      %42 = sbr.rel (0) target = $region17
    $region16: #{transition_pallas.1} parent=1 // pred_region
      %44 = vsyncadd [#allocation6], 0
      %s45 = sshll.u32 %s3, 4
      %s46 = int_to_ptr.hbm [resolvable:$true] %s45
      %s47 = sshll.u32 [#allocation7], 4
      %s48 = int_to_ptr.vmem [resolvable:$true] %s47
      %53 = dma.hbm_to_vmem [thread:$0]  %s46, 4096, %s48, [#allocation6], 64, 64, 4
    $region17: #{transition_pallas.1} parent=1 // pred_fallthru
      _
    // Predicated region
    $region18: #{transition_pallas.1} parent=1 // pred_check
      _
    $region19: #{transition_pallas.1} parent=1 // pred_check_branch
      %55 = sbr.rel (0) target = $region21
    $region20: #{transition_pallas.1} parent=1 // pred_region
      _
    $region21: #{transition_pallas.1} parent=1 // pred_fallthru
      _
    // Predicated region
    $region22: #{transition_pallas.1} parent=1 // pred_check
      _
    $region23: #{transition_pallas.1} parent=1 // pred_check_branch
      %57 = sbr.rel (0) target = $region25
    $region24: #{transition_pallas.1} parent=1 // pred_region
      %59 = dma.done [#allocation3], 128
    $region25: #{transition_pallas.1} parent=1 // pred_fallthru
      _
    // Predicated region
    $region26: #{transition_pallas.1} parent=1 // pred_check
      _
    $region27: #{transition_pallas.1} parent=1 // pred_check_branch
      %61 = sbr.rel (0) target = $region29
    $region28: #{transition_pallas.1} parent=1 // pred_region
      %63 = dma.done [#allocation6], 4096
    $region29: #{transition_pallas.1} parent=1 // pred_fallthru
      _
    // Predicated region
    $region30: #{transition_pallas.1} parent=1 // pred_check
      _
    $region31: #{transition_pallas.1} parent=1 // pred_check_branch
      %65 = sbr.rel (0) target = $region33
    $region32: #{transition_pallas.1} parent=1 // pred_region
      %67 = dma.done [#allocation6], 4096
    $region33: #{transition_pallas.1} parent=1 // pred_fallthru
      _
    %v68 = vld [vmem:[#allocation2] sm:$0xf]
    %v69 = vld [vmem:[#allocation2 + $0x4] sm:$0xf]
    %v70 = vunpack.c.l.bf16 %v68
    %v71 = vunpack.c.l.bf16 %v69
    %72 = vadd.xlane.f32.xlu0 %v70
    %v73 = vpop.xlane.xlu0 %72
    %74 = vadd.xlane.f32.xlu0 %v71
    %v75 = vpop.xlane.xlu0 %74
    %v76 = vrcp.pop 128.0
    %v77 = vmul.f32 128.0, %v76
    %v78 = vsub.f32 1.0, %v77
    %v79 = vmul.f32 %v76, %v78
    %v80 = vadd.f32 %v76, %v79
    %vm81 = vweird.f32 %v76
    %v82 = vsel %vm81, %v76, %v80
    %v83 = vmul.f32 %v73, %v82
    %v84 = vmul.f32 %v75, %v82
    %v85 = vmul.f32 %v70, %v70
    %v86 = vmul.f32 %v71, %v71
    %87 = vadd.xlane.f32.xlu0 %v85
    %v88 = vpop.xlane.xlu0 %87
    %89 = vadd.xlane.f32.xlu0 %v86
    %v90 = vpop.xlane.xlu0 %89
    %v91 = vmul.f32 %v88, %v82
    %v92 = vmul.f32 %v90, %v82
    %v93 = vmul.f32 %v83, %v83
    %v94 = vmul.f32 %v84, %v84
    %v95 = vsub.f32 %v91, %v93
    %v96 = vsub.f32 %v92, %v94
    %v97 = vsub.f32 %v70, %v83
    %v98 = vsub.f32 %v71, %v84
    %v99 = vadd.f32 %v95, 1e-05
    %v100 = vadd.f32 %v96, 1e-05
    %v101 = vrsqrt.pop %v99
    %v102 = vmul.f32 %v101, %v99
    %v103 = vmul.f32 %v102, %v101
    %v104 = vmul.f32 0.5, %v103
    %v105 = vsub.f32 1.5, %v104
    %v106 = vmul.f32 %v101, %v105
    %vm107 = vweird.f32 %v99
    %vm108 = vweird.f32 %v101
    %vm109 = vmor %vm107, %vm108
    %v110 = vsel %vm109, %v101, %v106
    %v111 = vrsqrt.pop %v100
    %v112 = vmul.f32 %v111, %v100
    %v113 = vmul.f32 %v112, %v111
    %v114 = vmul.f32 0.5, %v113
    %v115 = vsub.f32 1.5, %v114
    %v116 = vmul.f32 %v111, %v115
    %vm117 = vweird.f32 %v100
    %vm118 = vweird.f32 %v111
    %vm119 = vmor %vm117, %vm118
    %v120 = vsel %vm119, %v111, %v116
    %v121 = vmul.f32 %v97, %v110
    %v122 = vmul.f32 %v98, %v120
    %v123 = vpack.c.bf16 %v122, %v121
    %v124 = vld [vmem:[#allocation5] sm:$0xff]
    %v125 = vld [vmem:[#allocation5 + $0x8] sm:$0xff]
    %v126 = vld [vmem:[#allocation5 + $0x10] sm:$0xff]
    %v127 = vld [vmem:[#allocation5 + $0x18] sm:$0xff]
    %v128 = vld [vmem:[#allocation5 + $0x20] sm:$0xff]
    %v129 = vld [vmem:[#allocation5 + $0x28] sm:$0xff]
    %v130 = vld [vmem:[#allocation5 + $0x30] sm:$0xff]
    %v131 = vld [vmem:[#allocation5 + $0x38] sm:$0xff]
    %v132 = vld [vmem:[#allocation5 + $0x40] sm:$0xff]
    %v133 = vld [vmem:[#allocation5 + $0x48] sm:$0xff]
    %v134 = vld [vmem:[#allocation5 + $0x50] sm:$0xff]
    %v135 = vld [vmem:[#allocation5 + $0x58] sm:$0xff]
    %v136 = vld [vmem:[#allocation5 + $0x60] sm:$0xff]
    %v137 = vld [vmem:[#allocation5 + $0x68] sm:$0xff]
    %v138 = vld [vmem:[#allocation5 + $0x70] sm:$0xff]
    %v139 = vld [vmem:[#allocation5 + $0x78] sm:$0xff]
    %v140 = vld [vmem:[#allocation5 + $0x80] sm:$0xff]
    %v141 = vld [vmem:[#allocation5 + $0x88] sm:$0xff]
    %v142 = vld [vmem:[#allocation5 + $0x90] sm:$0xff]
    %v143 = vld [vmem:[#allocation5 + $0x98] sm:$0xff]
    %v144 = vld [vmem:[#allocation5 + $0xa0] sm:$0xff]
    %v145 = vld [vmem:[#allocation5 + $0xa8] sm:$0xff]
    %v146 = vld [vmem:[#allocation5 + $0xb0] sm:$0xff]
    %v147 = vld [vmem:[#allocation5 + $0xb8] sm:$0xff]
    %v148 = vld [vmem:[#allocation5 + $0xc0] sm:$0xff]
    %v149 = vld [vmem:[#allocation5 + $0xc8] sm:$0xff]
    %v150 = vld [vmem:[#allocation5 + $0xd0] sm:$0xff]
    %v151 = vld [vmem:[#allocation5 + $0xd8] sm:$0xff]
    %v152 = vld [vmem:[#allocation5 + $0xe0] sm:$0xff]
    %v153 = vld [vmem:[#allocation5 + $0xe8] sm:$0xff]
    %v154 = vld [vmem:[#allocation5 + $0xf0] sm:$0xff]
    %v155 = vld [vmem:[#allocation5 + $0xf8] sm:$0xff]
    %v188 = vunpack.c.l.b16 %v124
    %v189 = vunpack.c.h.b16 %v124
    %v190 = vunpack.c.l.b16 %v125
    %v191 = vunpack.c.h.b16 %v125
    %v192 = vunpack.c.l.b16 %v126
    %v193 = vunpack.c.h.b16 %v126
    %v194 = vunpack.c.l.b16 %v127
    %v195 = vunpack.c.h.b16 %v127
    %v196 = vunpack.c.l.b16 %v128
    %v197 = vunpack.c.h.b16 %v128
    %v198 = vunpack.c.l.b16 %v129
    %v199 = vunpack.c.h.b16 %v129
    %v200 = vunpack.c.l.b16 %v130
    %v201 = vunpack.c.h.b16 %v130
    %v202 = vunpack.c.l.b16 %v131
    %v203 = vunpack.c.h.b16 %v131
    %v204 = vunpack.c.l.b16 %v132
    %v205 = vunpack.c.h.b16 %v132
    %v206 = vunpack.c.l.b16 %v133
    %v207 = vunpack.c.h.b16 %v133
    %v208 = vunpack.c.l.b16 %v134
    %v209 = vunpack.c.h.b16 %v134
    %v210 = vunpack.c.l.b16 %v135
    %v211 = vunpack.c.h.b16 %v135
    %v212 = vunpack.c.l.b16 %v136
    %v213 = vunpack.c.h.b16 %v136
    %v214 = vunpack.c.l.b16 %v137
    %v215 = vunpack.c.h.b16 %v137
    %v216 = vunpack.c.l.b16 %v138
    %v217 = vunpack.c.h.b16 %v138
    %v218 = vunpack.c.l.b16 %v139
    %v219 = vunpack.c.h.b16 %v139
    %v220 = vunpack.c.l.b16 %v140
    %v221 = vunpack.c.h.b16 %v140
    %v222 = vunpack.c.l.b16 %v141
    %v223 = vunpack.c.h.b16 %v141
    %v224 = vunpack.c.l.b16 %v142
    %v225 = vunpack.c.h.b16 %v142
    %v226 = vunpack.c.l.b16 %v143
    %v227 = vunpack.c.h.b16 %v143
    %v228 = vunpack.c.l.b16 %v144
    %v229 = vunpack.c.h.b16 %v144
    %v230 = vunpack.c.l.b16 %v145
    %v231 = vunpack.c.h.b16 %v145
    %v232 = vunpack.c.l.b16 %v146
    %v233 = vunpack.c.h.b16 %v146
    %v234 = vunpack.c.l.b16 %v147
    %v235 = vunpack.c.h.b16 %v147
    %v236 = vunpack.c.l.b16 %v148
    %v237 = vunpack.c.h.b16 %v148
    %v238 = vunpack.c.l.b16 %v149
    %v239 = vunpack.c.h.b16 %v149
    %v240 = vunpack.c.l.b16 %v150
    %v241 = vunpack.c.h.b16 %v150
    %v242 = vunpack.c.l.b16 %v151
    %v243 = vunpack.c.h.b16 %v151
    %v244 = vunpack.c.l.b16 %v152
    %v245 = vunpack.c.h.b16 %v152
    %v246 = vunpack.c.l.b16 %v153
    %v247 = vunpack.c.h.b16 %v153
    %v248 = vunpack.c.l.b16 %v154
    %v249 = vunpack.c.h.b16 %v154
    %v250 = vunpack.c.l.b16 %v155
    %v251 = vunpack.c.h.b16 %v155
    %v252 = vpack.c.b16 %v192, %v188
    %v253 = vpack.c.b16 %v193, %v189
    %v254 = vpack.c.b16 %v194, %v190
    %v255 = vpack.c.b16 %v195, %v191
    %v256 = vpack.c.b16 %v200, %v196
    %v257 = vpack.c.b16 %v201, %v197
    %v258 = vpack.c.b16 %v202, %v198
    %v259 = vpack.c.b16 %v203, %v199
    %v260 = vpack.c.b16 %v208, %v204
    %v261 = vpack.c.b16 %v209, %v205
    %v262 = vpack.c.b16 %v210, %v206
    %v263 = vpack.c.b16 %v211, %v207
    %v264 = vpack.c.b16 %v216, %v212
    %v265 = vpack.c.b16 %v217, %v213
    %v266 = vpack.c.b16 %v218, %v214
    %v267 = vpack.c.b16 %v219, %v215
    %v268 = vpack.c.b16 %v224, %v220
    %v269 = vpack.c.b16 %v225, %v221
    %v270 = vpack.c.b16 %v226, %v222
    %v271 = vpack.c.b16 %v227, %v223
    %v272 = vpack.c.b16 %v232, %v228
    %v273 = vpack.c.b16 %v233, %v229
    %v274 = vpack.c.b16 %v234, %v230
    %v275 = vpack.c.b16 %v235, %v231
    %v276 = vpack.c.b16 %v240, %v236
    %v277 = vpack.c.b16 %v241, %v237
    %v278 = vpack.c.b16 %v242, %v238
    %v279 = vpack.c.b16 %v243, %v239
    %v280 = vpack.c.b16 %v248, %v244
    %v281 = vpack.c.b16 %v249, %v245
    %v282 = vpack.c.b16 %v250, %v246
    %v283 = vpack.c.b16 %v251, %v247
    %316 = vmatpush.bf16.msra.mxu0 %v280
    %317 = vmatpush.bf16.msra.mxu0 %v276
    %318 = vmatpush.bf16.msra.mxu0 %v272
    %319 = vmatpush.bf16.msra.mxu0 %v268
    %320 = vmatpush.bf16.msra.mxu0 %v264
    %321 = vmatpush.bf16.msra.mxu0 %v260
    %322 = vmatpush.bf16.msra.mxu0 %v256
    %323 = vmatpush.bf16.msra.mxu0 %v252
    %324 = vmatmul.bf16.gmra.mxu0 %v123
    %v325 = vpop.f32.mrf.mxu0
    %v326 = vadd.f32 0.0, %v325
    %v327 = vpop.f32.mrf.mxu0
    %v328 = vadd.f32 0.0, %v327
    %329 = vdwg.mxu0
    %330 = vmatpush.bf16.msra.mxu0 %v281
    %331 = vmatpush.bf16.msra.mxu0 %v277
    %332 = vmatpush.bf16.msra.mxu0 %v273
    %333 = vmatpush.bf16.msra.mxu0 %v269
    %334 = vmatpush.bf16.msra.mxu0 %v265
    %335 = vmatpush.bf16.msra.mxu0 %v261
    %336 = vmatpush.bf16.msra.mxu0 %v257
    %337 = vmatpush.bf16.msra.mxu0 %v253
    %338 = vmatmul.bf16.gmra.mxu0 %v123
    %v339 = vpop.f32.mrf.mxu0
    %v340 = vadd.f32 0.0, %v339
    %v341 = vpop.f32.mrf.mxu0
    %v342 = vadd.f32 0.0, %v341
    %343 = vdwg.mxu0
    %344 = vmatpush.bf16.msra.mxu0 %v282
    %345 = vmatpush.bf16.msra.mxu0 %v278
    %346 = vmatpush.bf16.msra.mxu0 %v274
    %347 = vmatpush.bf16.msra.mxu0 %v270
    %348 = vmatpush.bf16.msra.mxu0 %v266
    %349 = vmatpush.bf16.msra.mxu0 %v262
    %350 = vmatpush.bf16.msra.mxu0 %v258
    %351 = vmatpush.bf16.msra.mxu0 %v254
    %352 = vmatmul.bf16.gmra.mxu0 %v123
    %v353 = vpop.f32.mrf.mxu0
    %v354 = vadd.f32 0.0, %v353
    %v355 = vpop.f32.mrf.mxu0
    %v356 = vadd.f32 0.0, %v355
    %357 = vdwg.mxu0
    %358 = vmatpush.bf16.msra.mxu0 %v283
    %359 = vmatpush.bf16.msra.mxu0 %v279
    %360 = vmatpush.bf16.msra.mxu0 %v275
    %361 = vmatpush.bf16.msra.mxu0 %v271
    %362 = vmatpush.bf16.msra.mxu0 %v267
    %363 = vmatpush.bf16.msra.mxu0 %v263
    %364 = vmatpush.bf16.msra.mxu0 %v259
    %365 = vmatpush.bf16.msra.mxu0 %v255
    %366 = vmatmul.bf16.gmra.mxu0 %v123
    %v367 = vpop.f32.mrf.mxu0
    %v368 = vadd.f32 0.0, %v367
    %v369 = vpop.f32.mrf.mxu0
    %v370 = vadd.f32 0.0, %v369
    %371 = vdwg.mxu0
    %v372 = vpack.c.bf16 %v340, %v326
    %v373 = vpack.c.bf16 %v368, %v354
    %v374 = vpack.c.bf16 %v342, %v328
    %v375 = vpack.c.bf16 %v370, %v356
    %v376 = vld [vmem:[%s2] sm:$0xf]
    %v378 = vperm.slane %v376, 0
    %v379 = vperm.slane %v376, 1
    %v380 = vperm.slane %v376, 2
    %v381 = vperm.slane %v376, 3
    %v386 = vpack.c.bf16 %v379, %v378
    %v387 = vpack.c.bf16 %v381, %v380
    %v390 = vunpack.c.l.b16 %v386
    %v391 = vunpack.c.h.b16 %v386
    %v392 = vunpack.c.l.b16 %v387
    %v393 = vunpack.c.h.b16 %v387
    %v394 = vpack.c.b16 %v390, %v390
    %v395 = vpack.c.b16 %v391, %v391
    %v396 = vpack.c.b16 %v392, %v392
    %v397 = vpack.c.b16 %v393, %v393
    %v399 = vpack.i.b16 %v394, %v394
    %v401 = vperm.slane %v399, 0
    %v403 = vpack.i.b16 %v395, %v395
    %v405 = vperm.slane %v403, 0
    %v407 = vpack.i.b16 %v396, %v396
    %v409 = vperm.slane %v407, 0
    %v411 = vpack.i.b16 %v397, %v397
    %v413 = vperm.slane %v411, 0
    %v414 = vunpack.c.l.bf16 %v372
    %v415 = vunpack.c.h.bf16 %v372
    %v416 = vunpack.c.l.bf16 %v373
    %v417 = vunpack.c.h.bf16 %v373
    %v418 = vunpack.c.l.bf16 %v374
    %v419 = vunpack.c.h.bf16 %v374
    %v420 = vunpack.c.l.bf16 %v375
    %v421 = vunpack.c.h.bf16 %v375
    %v422 = vunpack.c.l.bf16 %v401
    %v423 = vunpack.c.l.bf16 %v405
    %v424 = vunpack.c.l.bf16 %v409
    %v425 = vunpack.c.l.bf16 %v413
    %v426 = vadd.f32 %v414, %v422
    %v427 = vadd.f32 %v415, %v423
    %v428 = vadd.f32 %v416, %v424
    %v429 = vadd.f32 %v417, %v425
    %v430 = vadd.f32 %v418, %v422
    %v431 = vadd.f32 %v419, %v423
    %v432 = vadd.f32 %v420, %v424
    %v433 = vadd.f32 %v421, %v425
    %v434 = vpack.c.bf16 %v427, %v426
    %v435 = vpack.c.bf16 %v429, %v428
    %v436 = vpack.c.bf16 %v431, %v430
    %v437 = vpack.c.bf16 %v433, %v432
    %v438 = vunpack.c.l.bf16 %v434
    %v439 = vunpack.c.h.bf16 %v434
    %v440 = vunpack.c.l.bf16 %v435
    %v441 = vunpack.c.h.bf16 %v435
    %v442 = vunpack.c.l.bf16 %v436
    %v443 = vunpack.c.h.bf16 %v436
    %v444 = vunpack.c.l.bf16 %v437
    %v445 = vunpack.c.h.bf16 %v437
    %v446 = vmul.f32 %v438, %v438
    %v447 = vmul.f32 %v439, %v439
    %v448 = vmul.f32 %v440, %v440
    %v449 = vmul.f32 %v441, %v441
    %v450 = vmul.f32 %v442, %v442
    %v451 = vmul.f32 %v443, %v443
    %v452 = vmul.f32 %v444, %v444
    %v453 = vmul.f32 %v445, %v445
    %v454 = vpack.c.bf16 %v447, %v446
    %v455 = vpack.c.bf16 %v449, %v448
    %v456 = vpack.c.bf16 %v451, %v450
    %v457 = vpack.c.bf16 %v453, %v452
    %v458 = vunpack.c.l.bf16 %v454
    %v459 = vunpack.c.h.bf16 %v454
    %v460 = vunpack.c.l.bf16 %v455
    %v461 = vunpack.c.h.bf16 %v455
    %v462 = vunpack.c.l.bf16 %v456
    %v463 = vunpack.c.h.bf16 %v456
    %v464 = vunpack.c.l.bf16 %v457
    %v465 = vunpack.c.h.bf16 %v457
    %v466 = vmul.f32 %v438, %v458
    %v467 = vmul.f32 %v439, %v459
    %v468 = vmul.f32 %v440, %v460
    %v469 = vmul.f32 %v441, %v461
    %v470 = vmul.f32 %v442, %v462
    %v471 = vmul.f32 %v443, %v463
    %v472 = vmul.f32 %v444, %v464
    %v473 = vmul.f32 %v445, %v465
    %v474 = vpack.c.bf16 %v467, %v466
    %v475 = vpack.c.bf16 %v469, %v468
    %v476 = vpack.c.bf16 %v471, %v470
    %v477 = vpack.c.bf16 %v473, %v472
    %v478 = vunpack.c.l.bf16 %v474
    %v479 = vunpack.c.h.bf16 %v474
    %v480 = vunpack.c.l.bf16 %v475
    %v481 = vunpack.c.h.bf16 %v475
    %v482 = vunpack.c.l.bf16 %v476
    %v483 = vunpack.c.h.bf16 %v476
    %v484 = vunpack.c.l.bf16 %v477
    %v485 = vunpack.c.h.bf16 %v477
    %v486 = vmul.f32 %v478, 0.044677734
    %v487 = vmul.f32 %v479, 0.044677734
    %v488 = vmul.f32 %v480, 0.044677734
    %v489 = vmul.f32 %v481, 0.044677734
    %v490 = vmul.f32 %v482, 0.044677734
    %v491 = vmul.f32 %v483, 0.044677734
    %v492 = vmul.f32 %v484, 0.044677734
    %v493 = vmul.f32 %v485, 0.044677734
    %v494 = vpack.c.bf16 %v487, %v486
    %v495 = vpack.c.bf16 %v489, %v488
    %v496 = vpack.c.bf16 %v491, %v490
    %v497 = vpack.c.bf16 %v493, %v492
    %v498 = vunpack.c.l.bf16 %v494
    %v499 = vunpack.c.h.bf16 %v494
    %v500 = vunpack.c.l.bf16 %v495
    %v501 = vunpack.c.h.bf16 %v495
    %v502 = vunpack.c.l.bf16 %v496
    %v503 = vunpack.c.h.bf16 %v496
    %v504 = vunpack.c.l.bf16 %v497
    %v505 = vunpack.c.h.bf16 %v497
    %v506 = vadd.f32 %v438, %v498
    %v507 = vadd.f32 %v439, %v499
    %v508 = vadd.f32 %v440, %v500
    %v509 = vadd.f32 %v441, %v501
    %v510 = vadd.f32 %v442, %v502
    %v511 = vadd.f32 %v443, %v503
    %v512 = vadd.f32 %v444, %v504
    %v513 = vadd.f32 %v445, %v505
    %v514 = vpack.c.bf16 %v507, %v506
    %v515 = vpack.c.bf16 %v509, %v508
    %v516 = vpack.c.bf16 %v511, %v510
    %v517 = vpack.c.bf16 %v513, %v512
    %v518 = vunpack.c.l.bf16 %v514
    %v519 = vunpack.c.h.bf16 %v514
    %v520 = vunpack.c.l.bf16 %v515
    %v521 = vunpack.c.h.bf16 %v515
    %v522 = vunpack.c.l.bf16 %v516
    %v523 = vunpack.c.h.bf16 %v516
    %v524 = vunpack.c.l.bf16 %v517
    %v525 = vunpack.c.h.bf16 %v517
    %v526 = vmul.f32 %v518, 0.796875
    %v527 = vmul.f32 %v519, 0.796875
    %v528 = vmul.f32 %v520, 0.796875
    %v529 = vmul.f32 %v521, 0.796875
    %v530 = vmul.f32 %v522, 0.796875
    %v531 = vmul.f32 %v523, 0.796875
    %v532 = vmul.f32 %v524, 0.796875
    %v533 = vmul.f32 %v525, 0.796875
    %v534 = vpack.c.bf16 %v527, %v526
    %v535 = vpack.c.bf16 %v529, %v528
    %v536 = vpack.c.bf16 %v531, %v530
    %v537 = vpack.c.bf16 %v533, %v532
    %v538 = vunpack.c.l.bf16 %v534
    %v539 = vunpack.c.h.bf16 %v534
    %v540 = vunpack.c.l.bf16 %v535
    %v541 = vunpack.c.h.bf16 %v535
    %v542 = vunpack.c.l.bf16 %v536
    %v543 = vunpack.c.h.bf16 %v536
    %v544 = vunpack.c.l.bf16 %v537
    %v545 = vunpack.c.h.bf16 %v537
    %v546 = vtanh.pop %v538
    %v547 = vtanh.pop %v539
    %v548 = vtanh.pop %v540
    %v549 = vtanh.pop %v541
    %v550 = vtanh.pop %v542
    %v551 = vtanh.pop %v543
    %v552 = vtanh.pop %v544
    %v553 = vtanh.pop %v545
    %v554 = vpack.c.bf16 %v547, %v546
    %v555 = vpack.c.bf16 %v549, %v548
    %v556 = vpack.c.bf16 %v551, %v550
    %v557 = vpack.c.bf16 %v553, %v552
    %v558 = vunpack.c.l.bf16 %v554
    %v559 = vunpack.c.h.bf16 %v554
    %v560 = vunpack.c.l.bf16 %v555
    %v561 = vunpack.c.h.bf16 %v555
    %v562 = vunpack.c.l.bf16 %v556
    %v563 = vunpack.c.h.bf16 %v556
    %v564 = vunpack.c.l.bf16 %v557
    %v565 = vunpack.c.h.bf16 %v557
    %v566 = vadd.f32 %v558, 1.0
    %v567 = vadd.f32 %v559, 1.0
    %v568 = vadd.f32 %v560, 1.0
    %v569 = vadd.f32 %v561, 1.0
    %v570 = vadd.f32 %v562, 1.0
    %v571 = vadd.f32 %v563, 1.0
    %v572 = vadd.f32 %v564, 1.0
    %v573 = vadd.f32 %v565, 1.0
    %v574 = vpack.c.bf16 %v567, %v566
    %v575 = vpack.c.bf16 %v569, %v568
    %v576 = vpack.c.bf16 %v571, %v570
    %v577 = vpack.c.bf16 %v573, %v572
    %v578 = vunpack.c.l.bf16 %v574
    %v579 = vunpack.c.h.bf16 %v574
    %v580 = vunpack.c.l.bf16 %v575
    %v581 = vunpack.c.h.bf16 %v575
    %v582 = vunpack.c.l.bf16 %v576
    %v583 = vunpack.c.h.bf16 %v576
    %v584 = vunpack.c.l.bf16 %v577
    %v585 = vunpack.c.h.bf16 %v577
    %v586 = vmul.f32 %v578, 0.5
    %v587 = vmul.f32 %v579, 0.5
    %v588 = vmul.f32 %v580, 0.5
    %v589 = vmul.f32 %v581, 0.5
    %v590 = vmul.f32 %v582, 0.5
    %v591 = vmul.f32 %v583, 0.5
    %v592 = vmul.f32 %v584, 0.5
    %v593 = vmul.f32 %v585, 0.5
    %v594 = vpack.c.bf16 %v587, %v586
    %v595 = vpack.c.bf16 %v589, %v588
    %v596 = vpack.c.bf16 %v591, %v590
    %v597 = vpack.c.bf16 %v593, %v592
    %v598 = vunpack.c.l.bf16 %v594
    %v599 = vunpack.c.h.bf16 %v594
    %v600 = vunpack.c.l.bf16 %v595
    %v601 = vunpack.c.h.bf16 %v595
    %v602 = vunpack.c.l.bf16 %v596
    %v603 = vunpack.c.h.bf16 %v596
    %v604 = vunpack.c.l.bf16 %v597
    %v605 = vunpack.c.h.bf16 %v597
    %v606 = vmul.f32 %v438, %v598
    %v607 = vmul.f32 %v439, %v599
    %v608 = vmul.f32 %v440, %v600
    %v609 = vmul.f32 %v441, %v601
    %v610 = vmul.f32 %v442, %v602
    %v611 = vmul.f32 %v443, %v603
    %v612 = vmul.f32 %v444, %v604
    %v613 = vmul.f32 %v445, %v605
    %v614 = vpack.c.bf16 %v610, %v606
    %v615 = vpack.c.bf16 %v611, %v607
    %v616 = vpack.c.bf16 %v612, %v608
    %v617 = vpack.c.bf16 %v613, %v609
    %v618 = vld [vmem:[#allocation7] sm:$0xf]
    %v619 = vld [vmem:[#allocation7 + $0x4] sm:$0xf]
    %v620 = vld [vmem:[#allocation7 + $0x8] sm:$0xf]
    %v621 = vld [vmem:[#allocation7 + $0xc] sm:$0xf]
    %v622 = vld [vmem:[#allocation7 + $0x10] sm:$0xf]
    %v623 = vld [vmem:[#allocation7 + $0x14] sm:$0xf]
    %v624 = vld [vmem:[#allocation7 + $0x18] sm:$0xf]
    %v625 = vld [vmem:[#allocation7 + $0x1c] sm:$0xf]
    %v626 = vld [vmem:[#allocation7 + $0x20] sm:$0xf]
    %v627 = vld [vmem:[#allocation7 + $0x24] sm:$0xf]
    %v628 = vld [vmem:[#allocation7 + $0x28] sm:$0xf]
    %v629 = vld [vmem:[#allocation7 + $0x2c] sm:$0xf]
    %v630 = vld [vmem:[#allocation7 + $0x30] sm:$0xf]
    %v631 = vld [vmem:[#allocation7 + $0x34] sm:$0xf]
    %v632 = vld [vmem:[#allocation7 + $0x38] sm:$0xf]
    %v633 = vld [vmem:[#allocation7 + $0x3c] sm:$0xf]
    %v634 = vld [vmem:[#allocation7 + $0x40] sm:$0xf]
    %v635 = vld [vmem:[#allocation7 + $0x44] sm:$0xf]
    %v636 = vld [vmem:[#allocation7 + $0x48] sm:$0xf]
    %v637 = vld [vmem:[#allocation7 + $0x4c] sm:$0xf]
    %v638 = vld [vmem:[#allocation7 + $0x50] sm:$0xf]
    %v639 = vld [vmem:[#allocation7 + $0x54] sm:$0xf]
    %v640 = vld [vmem:[#allocation7 + $0x58] sm:$0xf]
    %v641 = vld [vmem:[#allocation7 + $0x5c] sm:$0xf]
    %v642 = vld [vmem:[#allocation7 + $0x60] sm:$0xf]
    %v643 = vld [vmem:[#allocation7 + $0x64] sm:$0xf]
    %v644 = vld [vmem:[#allocation7 + $0x68] sm:$0xf]
    %v645 = vld [vmem:[#allocation7 + $0x6c] sm:$0xf]
    %v646 = vld [vmem:[#allocation7 + $0x70] sm:$0xf]
    %v647 = vld [vmem:[#allocation7 + $0x74] sm:$0xf]
    %v648 = vld [vmem:[#allocation7 + $0x78] sm:$0xf]
    %v649 = vld [vmem:[#allocation7 + $0x7c] sm:$0xf]
    %v650 = vld [vmem:[#allocation7 + $0x80] sm:$0xf]
    %v651 = vld [vmem:[#allocation7 + $0x84] sm:$0xf]
    %v652 = vld [vmem:[#allocation7 + $0x88] sm:$0xf]
    %v653 = vld [vmem:[#allocation7 + $0x8c] sm:$0xf]
    %v654 = vld [vmem:[#allocation7 + $0x90] sm:$0xf]
    %v655 = vld [vmem:[#allocation7 + $0x94] sm:$0xf]
    %v656 = vld [vmem:[#allocation7 + $0x98] sm:$0xf]
    %v657 = vld [vmem:[#allocation7 + $0x9c] sm:$0xf]
    %v658 = vld [vmem:[#allocation7 + $0xa0] sm:$0xf]
    %v659 = vld [vmem:[#allocation7 + $0xa4] sm:$0xf]
    %v660 = vld [vmem:[#allocation7 + $0xa8] sm:$0xf]
    %v661 = vld [vmem:[#allocation7 + $0xac] sm:$0xf]
    %v662 = vld [vmem:[#allocation7 + $0xb0] sm:$0xf]
    %v663 = vld [vmem:[#allocation7 + $0xb4] sm:$0xf]
    %v664 = vld [vmem:[#allocation7 + $0xb8] sm:$0xf]
    %v665 = vld [vmem:[#allocation7 + $0xbc] sm:$0xf]
    %v666 = vld [vmem:[#allocation7 + $0xc0] sm:$0xf]
    %v667 = vld [vmem:[#allocation7 + $0xc4] sm:$0xf]
    %v668 = vld [vmem:[#allocation7 + $0xc8] sm:$0xf]
    %v669 = vld [vmem:[#allocation7 + $0xcc] sm:$0xf]
    %v670 = vld [vmem:[#allocation7 + $0xd0] sm:$0xf]
    %v671 = vld [vmem:[#allocation7 + $0xd4] sm:$0xf]
    %v672 = vld [vmem:[#allocation7 + $0xd8] sm:$0xf]
    %v673 = vld [vmem:[#allocation7 + $0xdc] sm:$0xf]
    %v674 = vld [vmem:[#allocation7 + $0xe0] sm:$0xf]
    %v675 = vld [vmem:[#allocation7 + $0xe4] sm:$0xf]
    %v676 = vld [vmem:[#allocation7 + $0xe8] sm:$0xf]
    %v677 = vld [vmem:[#allocation7 + $0xec] sm:$0xf]
    %v678 = vld [vmem:[#allocation7 + $0xf0] sm:$0xf]
    %v679 = vld [vmem:[#allocation7 + $0xf4] sm:$0xf]
    %v680 = vld [vmem:[#allocation7 + $0xf8] sm:$0xf]
    %v681 = vld [vmem:[#allocation7 + $0xfc] sm:$0xf]
    %v682 = vld [vmem:[%s4] sm:$0x1]
    %v684 = vperm.slane %v682, 0
    %v750 = vunpack.c.l.b16 %v618
    %v751 = vunpack.c.l.b16 %v619
    %v752 = vunpack.c.l.b16 %v620
    %v753 = vunpack.c.l.b16 %v621
    %v754 = vunpack.c.l.b16 %v622
    %v755 = vunpack.c.l.b16 %v623
    %v756 = vunpack.c.l.b16 %v624
    %v757 = vunpack.c.l.b16 %v625
    %v758 = vunpack.c.l.b16 %v626
    %v759 = vunpack.c.l.b16 %v627
    %v760 = vunpack.c.l.b16 %v628
    %v761 = vunpack.c.l.b16 %v629
    %v762 = vunpack.c.l.b16 %v630
    %v763 = vunpack.c.l.b16 %v631
    %v764 = vunpack.c.l.b16 %v632
    %v765 = vunpack.c.l.b16 %v633
    %v766 = vunpack.c.l.b16 %v634
    %v767 = vunpack.c.l.b16 %v635
    %v768 = vunpack.c.l.b16 %v636
    %v769 = vunpack.c.l.b16 %v637
    %v770 = vunpack.c.l.b16 %v638
    %v771 = vunpack.c.l.b16 %v639
    %v772 = vunpack.c.l.b16 %v640
    %v773 = vunpack.c.l.b16 %v641
    %v774 = vunpack.c.l.b16 %v642
    %v775 = vunpack.c.l.b16 %v643
    %v776 = vunpack.c.l.b16 %v644
    %v777 = vunpack.c.l.b16 %v645
    %v778 = vunpack.c.l.b16 %v646
    %v779 = vunpack.c.l.b16 %v647
    %v780 = vunpack.c.l.b16 %v648
    %v781 = vunpack.c.l.b16 %v649
    %v782 = vunpack.c.l.b16 %v650
    %v783 = vunpack.c.l.b16 %v651
    %v784 = vunpack.c.l.b16 %v652
    %v785 = vunpack.c.l.b16 %v653
    %v786 = vunpack.c.l.b16 %v654
    %v787 = vunpack.c.l.b16 %v655
    %v788 = vunpack.c.l.b16 %v656
    %v789 = vunpack.c.l.b16 %v657
    %v790 = vunpack.c.l.b16 %v658
    %v791 = vunpack.c.l.b16 %v659
    %v792 = vunpack.c.l.b16 %v660
    %v793 = vunpack.c.l.b16 %v661
    %v794 = vunpack.c.l.b16 %v662
    %v795 = vunpack.c.l.b16 %v663
    %v796 = vunpack.c.l.b16 %v664
    %v797 = vunpack.c.l.b16 %v665
    %v798 = vunpack.c.l.b16 %v666
    %v799 = vunpack.c.l.b16 %v667
    %v800 = vunpack.c.l.b16 %v668
    %v801 = vunpack.c.l.b16 %v669
    %v802 = vunpack.c.l.b16 %v670
    %v803 = vunpack.c.l.b16 %v671
    %v804 = vunpack.c.l.b16 %v672
    %v805 = vunpack.c.l.b16 %v673
    %v806 = vunpack.c.l.b16 %v674
    %v807 = vunpack.c.l.b16 %v675
    %v808 = vunpack.c.l.b16 %v676
    %v809 = vunpack.c.l.b16 %v677
    %v810 = vunpack.c.l.b16 %v678
    %v811 = vunpack.c.l.b16 %v679
    %v812 = vunpack.c.l.b16 %v680
    %v813 = vunpack.c.l.b16 %v681
    %v814 = vpack.c.b16 %v751, %v750
    %v815 = vpack.c.b16 %v753, %v752
    %v816 = vpack.c.b16 %v755, %v754
    %v817 = vpack.c.b16 %v757, %v756
    %v818 = vpack.c.b16 %v759, %v758
    %v819 = vpack.c.b16 %v761, %v760
    %v820 = vpack.c.b16 %v763, %v762
    %v821 = vpack.c.b16 %v765, %v764
    %v822 = vpack.c.b16 %v767, %v766
    %v823 = vpack.c.b16 %v769, %v768
    %v824 = vpack.c.b16 %v771, %v770
    %v825 = vpack.c.b16 %v773, %v772
    %v826 = vpack.c.b16 %v775, %v774
    %v827 = vpack.c.b16 %v777, %v776
    %v828 = vpack.c.b16 %v779, %v778
    %v829 = vpack.c.b16 %v781, %v780
    %v830 = vpack.c.b16 %v783, %v782
    %v831 = vpack.c.b16 %v785, %v784
    %v832 = vpack.c.b16 %v787, %v786
    %v833 = vpack.c.b16 %v789, %v788
    %v834 = vpack.c.b16 %v791, %v790
    %v835 = vpack.c.b16 %v793, %v792
    %v836 = vpack.c.b16 %v795, %v794
    %v837 = vpack.c.b16 %v797, %v796
    %v838 = vpack.c.b16 %v799, %v798
    %v839 = vpack.c.b16 %v801, %v800
    %v840 = vpack.c.b16 %v803, %v802
    %v841 = vpack.c.b16 %v805, %v804
    %v842 = vpack.c.b16 %v807, %v806
    %v843 = vpack.c.b16 %v809, %v808
    %v844 = vpack.c.b16 %v811, %v810
    %v845 = vpack.c.b16 %v813, %v812
    %878 = vmatpush.bf16.msra.mxu0 %v821
    %879 = vmatpush.bf16.msra.mxu0 %v820
    %880 = vmatpush.bf16.msra.mxu0 %v819
    %881 = vmatpush.bf16.msra.mxu0 %v818
    %882 = vmatpush.bf16.msra.mxu0 %v817
    %883 = vmatpush.bf16.msra.mxu0 %v816
    %884 = vmatpush.bf16.msra.mxu0 %v815
    %885 = vmatpush.bf16.msra.mxu0 %v814
    %886 = vmatmul.bf16.gmra.mxu0 %v614
    %v887 = vpop.f32.mrf.mxu0
    %v888 = vadd.f32 %v684, %v887
    %v889 = vpop.f32.mrf.mxu0
    %v890 = vadd.f32 %v684, %v889
    %891 = vdwg.mxu0
    %892 = vmatpush.bf16.msra.mxu0 %v829
    %893 = vmatpush.bf16.msra.mxu0 %v828
    %894 = vmatpush.bf16.msra.mxu0 %v827
    %895 = vmatpush.bf16.msra.mxu0 %v826
    %896 = vmatpush.bf16.msra.mxu0 %v825
    %897 = vmatpush.bf16.msra.mxu0 %v824
    %898 = vmatpush.bf16.msra.mxu0 %v823
    %899 = vmatpush.bf16.msra.mxu0 %v822
    %900 = vmatmul.bf16.gmra.mxu0 %v615
    %v901 = vpop.f32.mrf.mxu0
    %v902 = vadd.f32 %v888, %v901
    %v903 = vpop.f32.mrf.mxu0
    %v904 = vadd.f32 %v890, %v903
    %905 = vdwg.mxu0
    %906 = vmatpush.bf16.msra.mxu0 %v837
    %907 = vmatpush.bf16.msra.mxu0 %v836
    %908 = vmatpush.bf16.msra.mxu0 %v835
    %909 = vmatpush.bf16.msra.mxu0 %v834
    %910 = vmatpush.bf16.msra.mxu0 %v833
    %911 = vmatpush.bf16.msra.mxu0 %v832
    %912 = vmatpush.bf16.msra.mxu0 %v831
    %913 = vmatpush.bf16.msra.mxu0 %v830
    %914 = vmatmul.bf16.gmra.mxu0 %v616
    %v915 = vpop.f32.mrf.mxu0
    %v916 = vadd.f32 %v902, %v915
    %v917 = vpop.f32.mrf.mxu0
    %v918 = vadd.f32 %v904, %v917
    %919 = vdwg.mxu0
    %920 = vmatpush.bf16.msra.mxu0 %v845
    %921 = vmatpush.bf16.msra.mxu0 %v844
    %922 = vmatpush.bf16.msra.mxu0 %v843
    %923 = vmatpush.bf16.msra.mxu0 %v842
    %924 = vmatpush.bf16.msra.mxu0 %v841
    %925 = vmatpush.bf16.msra.mxu0 %v840
    %926 = vmatpush.bf16.msra.mxu0 %v839
    %927 = vmatpush.bf16.msra.mxu0 %v838
    %928 = vmatmul.bf16.gmra.mxu0 %v617
    %v929 = vpop.f32.mrf.mxu0
    %v930 = vadd.f32 %v916, %v929
    %v931 = vpop.f32.mrf.mxu0
    %v932 = vadd.f32 %v918, %v931
    %933 = vdwg.mxu0
    %v934 = vpack.c.bf16 %v930, %v930
    %v935 = vpack.c.bf16 %v932, %v932
    %936 = vst [vmem:[#allocation8] sm:$0xf] %v934
    %937 = vst [vmem:[#allocation8 + $0x4] sm:$0xf] %v935
    // Predicated region
    $region34: #{transition_pallas.1} parent=1 // pred_check
      _
    $region35: #{transition_pallas.1} parent=1 // pred_check_branch
      %939 = sbr.rel (0) target = $region37
    $region36: #{transition_pallas.1} parent=1 // pred_region
      %941 = vsyncadd [#allocation4], 0
      %s942 = sshll.u32 [#allocation8], 4
      %s943 = int_to_ptr.vmem [resolvable:$true] %s942
      %s944 = sshll.u32 %s5, 4
      %s945 = int_to_ptr.hbm [resolvable:$true] %s944
      %950 = dma.vmem_to_hbm [thread:$0]  %s943, 128, %s945, [#allocation4], 64, 64, 4
    $region37: #{transition_pallas.1} parent=1 // pred_fallthru
      _
    // Predicated region
    $region38: #{transition_pallas.1} parent=1 // pred_check
      _
    $region39: #{transition_pallas.1} parent=1 // pred_check_branch
      %952 = sbr.rel (0) target = $region41
    $region40: #{transition_pallas.1} parent=1 // pred_region
      %954 = dma.done [#allocation4], 128
    $region41: #{transition_pallas.1} parent=1 // pred_fallthru
      _
    %955 = vsyncpa [#allocation3], 1
    %956 = vsyncpa [#allocation6], 1
    %957 = vsyncpa [#allocation4], 1

</llo_original>
